<compile_context>
chip_gen: v7x
topology: tpu7x:2x2x1
jax: 0.10.0
libtpu: 0.0.40
codegen_flags: <defaults>
</compile_context>

<pallas_src>
import functools

import jax
import jax.numpy as jnp
from jax import lax
from jax.experimental import pallas as pl
from jax.experimental.pallas import tpu as pltpu

_SUB = 8  # f32 sublane count; partial-stat accumulators are (_SUB, H)


def _round_down(x, n):
    return (x // n) * n


def _vmem_capacity_bytes():
    try:
        cap = int(getattr(pltpu.get_tpu_info(), "vmem_capacity_bytes", 0))
        if cap > 0:
            return cap
    except Exception:
        pass
    return 64 * 1024 * 1024  # conservative default (v7x per-core VMEM)


# --------------------------- fused single pass -------------------------------
def bn_fused_kernel(x_ref, g_ref, b_ref, o_ref, *, inv_m, eps):
    x = x_ref[...].astype(jnp.float32)
    mean = jnp.sum(x, axis=0, keepdims=True) * inv_m
    # NOTE: E[x^2] - mean^2 in f32 (clamped); adequate for forward BN.
    var = jnp.maximum(jnp.sum(x * x, axis=0, keepdims=True) * inv_m
                      - mean * mean, 0.0)
    inv_std = lax.rsqrt(var + eps)               # EUP
    scale = g_ref[...] * inv_std
    shift = b_ref[...] - mean * scale
    o_ref[...] = (x * scale + shift).astype(o_ref.dtype)


# ------------------------------ pass 1: stats --------------------------------
def bn_stats_kernel(x_ref, psum_ref, psq_ref, *, tile_m, total_m, n_inner,
                    any_ragged):
    i = pl.program_id(1)

    @pl.when(i == 0)
    def _init():
        psum_ref[...] = jnp.zeros_like(psum_ref)
        psq_ref[...] = jnp.zeros_like(psq_ref)

    def _accumulate(x):
        h = x.shape[-1]
        if tile_m % _SUB == 0:
            # (tile_m, H) -> (tile_m//8, 8, H) is layout-preserving; the axis-0
            # sum is pure VALU adds (no per-step cross-sublane XLU reduce).
            xr = x.reshape(tile_m // _SUB, _SUB, h)
            psum_ref[0] += jnp.sum(xr, axis=0)
            psq_ref[0] += jnp.sum(xr * xr, axis=0)
        else:  # pathological tiny-M fallback (M < 8): single-sublane accumulate
            psum_ref[0, 0:1, :] += jnp.sum(x, axis=0, keepdims=True)
            psq_ref[0, 0:1, :] += jnp.sum(x * x, axis=0, keepdims=True)

    if not any_ragged:
        _accumulate(x_ref[...].astype(jnp.float32))
    else:
        c = pl.program_id(0)
        row_start = (c * n_inner + i) * tile_m
        is_full = row_start + tile_m <= total_m

        @pl.when(is_full)
        def _full():
            _accumulate(x_ref[...].astype(jnp.float32))

        @pl.when(jnp.logical_not(is_full))
        def _ragged():
            x = x_ref[...].astype(jnp.float32)
            rows = row_start + lax.broadcasted_iota(jnp.int32, (tile_m, 1), 0)
            _accumulate(jnp.where(rows < total_m, x, 0.0))


# ------------------------------ pass 2: apply ---------------------------------
def bn_apply_kernel(x_ref, psum_ref, psq_ref, g_ref, b_ref, o_ref, *, inv_m, eps):
    h = x_ref.shape[-1]
    # Tiny per-channel fold (combine per-core / per-sublane partials); this is
    # recomputed per grid step but fully hidden under the multi-MiB tile DMA.
    s = jnp.sum(psum_ref[...].reshape(-1, h), axis=0, keepdims=True)   # (1, H)
    sq = jnp.sum(psq_ref[...].reshape(-1, h), axis=0, keepdims=True)   # (1, H)
    mean = s * inv_m
    var = jnp.maximum(sq * inv_m - mean * mean, 0.0)
    inv_std = lax.rsqrt(var + eps)
    scale = g_ref[...] * inv_std
    shift = b_ref[...] - mean * scale
    x = x_ref[...].astype(jnp.float32)
    o_ref[...] = (x * scale + shift).astype(o_ref.dtype)


# --------------------------------- wrapper ------------------------------------
def batch_normalization(x, gamma, beta, *, eps=1e-5, force_two_pass=False,
                        tile_rows=None):
    """BatchNorm1d forward (training-mode batch statistics) over the last dim."""
    orig_shape = x.shape
    H = orig_shape[-1]
    M = x.size // H
    x2 = x.reshape(M, H)                               # metadata-only reshape
    g2 = gamma.astype(jnp.float32).reshape(1, H)
    b2 = beta.astype(jnp.float32).reshape(1, H)

    itemsize = x.dtype.itemsize
    vmem_cap = _vmem_capacity_bytes()
    inv_m = 1.0 / M
    eps = float(eps)

    # ---------------- fused single-pass path (x resident in VMEM) ------------
    fused_bytes = M * H * (2 * itemsize + 12) + 4 * H * 4   # in + out + f32 temps
    if not force_two_pass and fused_bytes <= int(0.45 * vmem_cap):
        out = pl.pallas_call(
            functools.partial(bn_fused_kernel, inv_m=inv_m, eps=eps),
            out_shape=jax.ShapeDtypeStruct((M, H), x.dtype),
            in_specs=[pl.BlockSpec(memory_space=pltpu.MemorySpace.VMEM)] * 3,
            out_specs=pl.BlockSpec(memory_space=pltpu.MemorySpace.VMEM),
            compiler_params=pltpu.CompilerParams(
                vmem_limit_bytes=int(min(0.9 * vmem_cap,
                                         fused_bytes + (4 << 20)))),
            cost_estimate=pl.CostEstimate(
                flops=5 * M * H, transcendentals=H,
                bytes_accessed=2 * M * H * itemsize),
        )(x2, g2, b2)
        return out.reshape(orig_shape)

    # ---------------- two-pass path -------------------------------------------
    row_bytes = H * itemsize
    tile_budget = int(0.40 * vmem_cap)       # bytes available for tile buffers
    target_block = 4 << 20                   # ~4 MiB x-blocks -> ~HBM roofline

    def _pick_tile(bufs_per_row):
        tm = min(target_block // max(1, row_bytes),
                 tile_budget // max(1, bufs_per_row * row_bytes))
        tm = min(max(_SUB, _round_down(tm, _SUB)), 16384)
        if M < _SUB:
            return M                          # block dim == full array dim
        return max(_SUB, min(tm, _round_down(M, _SUB)))

    # pass 1 pipelines only the x tile (outputs are tiny resident accumulators);
    # pass 2 pipelines x in + y out.
    tm1 = tile_rows if tile_rows is not None else _pick_tile(bufs_per_row=2)
    tm2 = tile_rows if tile_rows is not None else _pick_tile(bufs_per_row=4)

    n_tiles1 = pl.cdiv(M, tm1)
    n_split = 2 if n_tiles1 >= 2 else 1       # 2-way "parallel" outer axis:
    n_inner = pl.cdiv(n_tiles1, n_split)      # uses both TensorCores on v7x
    any_ragged = (n_split * n_inner * tm1) != M

    vmem_limit1 = int(min(0.85 * vmem_cap,
                          2 * tm1 * row_bytes + 4 * _SUB * H * 4 + (4 << 20)))
    vmem_limit2 = int(min(0.85 * vmem_cap,
                          4 * tm2 * row_bytes + 2 * n_split * _SUB * H * 4
                          + 4 * H * 4 + (4 << 20)))

    stat_shape = (n_split, _SUB, H)
    psum, psq = pl.pallas_call(
        functools.partial(bn_stats_kernel, tile_m=tm1, total_m=M,
                          n_inner=n_inner, any_ragged=any_ragged),
        out_shape=(jax.ShapeDtypeStruct(stat_shape, jnp.float32),
                   jax.ShapeDtypeStruct(stat_shape, jnp.float32)),
        grid_spec=pltpu.PrefetchScalarGridSpec(
            num_scalar_prefetch=0,
            grid=(n_split, n_inner),
            in_specs=[pl.BlockSpec((tm1, H), lambda c, i: (c * n_inner + i, 0))],
            out_specs=(pl.BlockSpec((1, _SUB, H), lambda c, i: (c, 0, 0)),
                       pl.BlockSpec((1, _SUB, H), lambda c, i: (c, 0, 0))),
        ),
        compiler_params=pltpu.CompilerParams(
            dimension_semantics=("parallel", "arbitrary"),
            vmem_limit_bytes=max(vmem_limit1, 16 << 20)),
        cost_estimate=pl.CostEstimate(
            flops=3 * M * H, transcendentals=0,
            bytes_accessed=M * H * itemsize + 2 * n_split * _SUB * H * 4),
    )(x2)

    n_tiles2 = pl.cdiv(M, tm2)
    out = pl.pallas_call(
        functools.partial(bn_apply_kernel, inv_m=inv_m, eps=eps),
        out_shape=jax.ShapeDtypeStruct((M, H), x.dtype),
        grid_spec=pltpu.PrefetchScalarGridSpec(
            num_scalar_prefetch=0,
            grid=(n_tiles2,),
            in_specs=[pl.BlockSpec((tm2, H), lambda i: (i, 0)),
                      pl.BlockSpec(stat_shape, lambda i: (0, 0, 0)),
                      pl.BlockSpec(stat_shape, lambda i: (0, 0, 0)),
                      pl.BlockSpec((1, H), lambda i: (0, 0)),
                      pl.BlockSpec((1, H), lambda i: (0, 0))],
            out_specs=pl.BlockSpec((tm2, H), lambda i: (i, 0)),
        ),
        compiler_params=pltpu.CompilerParams(
            dimension_semantics=("parallel",),
            vmem_limit_bytes=max(vmem_limit2, 16 << 20)),
        cost_estimate=pl.CostEstimate(
            flops=2 * M * H, transcendentals=H,
            bytes_accessed=2 * M * H * itemsize),
    )(x2, psum, psq, g2, b2)

    # TODO(synk): running_mean / running_var buffer updates (nn.BatchNorm1d
    # training-side state) are not emitted; they do not affect this output.
    return out.reshape(orig_shape)


if __name__ == "__main__":
    key = jax.random.PRNGKey(0)
    eps = 1e-5

    def reference(xin, gamma, beta):
        h = xin.shape[-1]
        xf = xin.reshape(-1, h)
        mean = xf.mean(axis=0)
        var = xf.var(axis=0)   # biased variance, as BN uses for normalization
        return (((xf - mean) / jnp.sqrt(var + eps)) * gamma + beta).reshape(xin.shape)

    ok = True

    # ---- small shape (exercises the fused single-pass path) -----------------
    B, S, H = 2, 8, 32
    kx, kg, kb, key = jax.random.split(key, 4)
    x = jax.random.normal(kx, (B, S, H), dtype=jnp.float32)
    stdv = 1.0 / (H ** 0.5)
    gamma = jax.random.uniform(kg, (H,), minval=-stdv, maxval=stdv, dtype=jnp.float32)
    beta = jax.random.uniform(kb, (H,), minval=-stdv, maxval=stdv, dtype=jnp.float32)
    out = jax.block_until_ready(batch_normalization(x, gamma, beta, eps=eps))
    ok &= bool(jnp.allclose(out, reference(x, gamma, beta), atol=1e-4, rtol=1e-4))

    # ---- ragged shape forced through the tiled two-pass path ----------------
    B2, S2, H2 = 4, 125, 96        # M=500 rows (ragged vs 64-row tiles), H!=128k
    kx, kg, kb, key = jax.random.split(key, 4)
    xb = jax.random.normal(kx, (B2, S2, H2), dtype=jnp.float32) * 1.5 + 0.3
    stdv2 = 1.0 / (H2 ** 0.5)
    gamma2 = jax.random.uniform(kg, (H2,), minval=-stdv2, maxval=stdv2, dtype=jnp.float32)
    beta2 = jax.random.uniform(kb, (H2,), minval=-stdv2, maxval=stdv2, dtype=jnp.float32)
    out2 = jax.block_until_ready(
        batch_normalization(xb, gamma2, beta2, eps=eps,
                            force_two_pass=True, tile_rows=64))
    ok &= bool(jnp.allclose(out2, reference(xb, gamma2, beta2), atol=1e-4, rtol=1e-4))

    assert ok, "mismatch vs reference"
    print("KERNEL_OK")
</pallas_src>

<mosaic_0001>
module attributes {stable_mosaic.version = 11 : i64} {
  func.func @bn_fused_kernel(%arg0: memref<16x32xf32, #tpu.memory_space<vmem>>, %arg1: memref<1x32xf32, #tpu.memory_space<vmem>>, %arg2: memref<1x32xf32, #tpu.memory_space<vmem>>, %arg3: memref<16x32xf32, #tpu.memory_space<vmem>>) attributes {dimension_semantics = [], scalar_prefetch = 0 : i64, scratch_operands = 0 : i64, tpu.core_type = #tpu.core_type<tc>} {
    %c0 = arith.constant 0 : index
    %c0_0 = arith.constant 0 : index
    %0 = vector.load %arg0[%c0, %c0_0] : memref<16x32xf32, #tpu.memory_space<vmem>>, vector<16x32xf32>
    %cst = arith.constant dense<0.000000e+00> : vector<32xf32>
    %1 = vector.multi_reduction <add>, %0, %cst [0] : vector<16x32xf32> to vector<32xf32>
    %2 = vector.shape_cast %1 : vector<32xf32> to vector<1x32xf32>
    %cst_1 = arith.constant 6.250000e-02 : f32
    %3 = vector.broadcast %cst_1 : f32 to vector<1x32xf32>
    %4 = arith.mulf %2, %3 : vector<1x32xf32>
    %5 = arith.mulf %0, %0 : vector<16x32xf32>
    %cst_2 = arith.constant dense<0.000000e+00> : vector<32xf32>
    %6 = vector.multi_reduction <add>, %5, %cst_2 [0] : vector<16x32xf32> to vector<32xf32>
    %7 = vector.shape_cast %6 : vector<32xf32> to vector<1x32xf32>
    %cst_3 = arith.constant 6.250000e-02 : f32
    %8 = vector.broadcast %cst_3 : f32 to vector<1x32xf32>
    %9 = arith.mulf %7, %8 : vector<1x32xf32>
    %10 = arith.mulf %4, %4 : vector<1x32xf32>
    %11 = arith.subf %9, %10 : vector<1x32xf32>
    %cst_4 = arith.constant 0.000000e+00 : f32
    %12 = vector.broadcast %cst_4 : f32 to vector<1x32xf32>
    %13 = arith.maximumf %11, %12 : vector<1x32xf32>
    %cst_5 = arith.constant 9.99999974E-6 : f32
    %14 = vector.broadcast %cst_5 : f32 to vector<1x32xf32>
    %15 = arith.addf %13, %14 : vector<1x32xf32>
    %16 = math.rsqrt %15 : vector<1x32xf32>
    %c0_6 = arith.constant 0 : index
    %c0_7 = arith.constant 0 : index
    %17 = vector.load %arg1[%c0_6, %c0_7] : memref<1x32xf32, #tpu.memory_space<vmem>>, vector<1x32xf32>
    %18 = arith.mulf %17, %16 : vector<1x32xf32>
    %c0_8 = arith.constant 0 : index
    %c0_9 = arith.constant 0 : index
    %19 = vector.load %arg2[%c0_8, %c0_9] : memref<1x32xf32, #tpu.memory_space<vmem>>, vector<1x32xf32>
    %20 = arith.mulf %4, %18 : vector<1x32xf32>
    %21 = arith.subf %19, %20 : vector<1x32xf32>
    %22 = vector.broadcast %18 : vector<1x32xf32> to vector<16x32xf32>
    %23 = arith.mulf %0, %22 : vector<16x32xf32>
    %24 = vector.broadcast %21 : vector<1x32xf32> to vector<16x32xf32>
    %25 = arith.addf %23, %24 : vector<16x32xf32>
    %c0_10 = arith.constant 0 : index
    %c0_11 = arith.constant 0 : index
    %26 = vector.load %arg3[%c0_10, %c0_11] : memref<16x32xf32, #tpu.memory_space<vmem>>, vector<16x32xf32>
    tpu.vector_store %arg3[%c0_10, %c0_11], %25 {strides = array<i32>} : memref<16x32xf32, #tpu.memory_space<vmem>>, vector<16x32xf32>,
    return
  }
}

</mosaic_0001>

<llo_original>
// kernel: tpu_custom_call.1
$region0: #{tpu_custom_call.1}
  #allocation0 [shape = 'u32[]', space=smem, size = 0x4, offset = 0x4, fixed_abs, tag = 'smem constant byte address 0x4 - core index']
  #allocation1 [shape = 'u32[144,128]{1,0:T(1,128)}', space=vmem, size = 0x12000, scoped, tag = 'internal scratch']
  %s0 = inlined_call_operand.hbm [shape: f32[16,32], index: 0, kind: input, shape index: {}]
  %s1 = inlined_call_operand.vmem [shape: f32[1,32], index: 1, kind: input, shape index: {}]
  %s2 = inlined_call_operand.vmem [shape: f32[1,32], index: 2, kind: input, shape index: {}]
  %s3 = inlined_call_operand.hbm [shape: f32[16,32], index: 3, kind: output, shape index: {}]
  %s4 = sld [smem:[#allocation0]]
  $region26: #{tpu_custom_call.1} parent=0
    _
  %s6 = ssub.s32 1, %s4
  %s7 = scalar_select 0, %s6, %s4
  $region1: #{tpu_custom_call.1} parent=0
    #allocation2 [shape = 'u8[8192]{0}', space=vmem, size = 0x2000, scoped, tag = 'input window, operand 0, single buffered']
    #allocation3 [shape = 's32[1]{0}', space=sflag, size = 0x4, scoped, tag = 'scoped memory for tpu_custom_call.1']
    #allocation4 [shape = 's32[1]{0}', space=sflag, size = 0x4, scoped, tag = 'scoped memory for tpu_custom_call.1']
    #allocation5 [shape = 'u8[8192]{0}', space=vmem, size = 0x2000, scoped, tag = 'output window, operand 0, single buffered']
    %8 = vsyncpa [#allocation3], 0
    %9 = vsyncpa [#allocation4], 0
    // Predicated region
    $region2: #{tpu_custom_call.1} parent=1 // pred_check
      _
    $region3: #{tpu_custom_call.1} parent=1 // pred_check_branch
      %11 = sbr.rel (0) target = $region5
    $region4: #{tpu_custom_call.1} parent=1 // pred_region
      %s13 = ssub.s32 256, 256
      %14 = vsyncadd [#allocation3], %s13
      %s15 = sshll.u32 [#allocation2], 4
      %s16 = int_to_ptr.vmem [resolvable:$true] %s15
      %21 = dma.hbm_to_vmem [thread:$0]  %s0, 256, %s16, [#allocation3], 128, 128, 8
    $region5: #{tpu_custom_call.1} parent=1 // pred_fallthru
      _
    // Predicated region
    $region6: #{tpu_custom_call.1} parent=1 // pred_check
      _
    $region7: #{tpu_custom_call.1} parent=1 // pred_check_branch
      %23 = sbr.rel (0) target = $region9
    $region8: #{tpu_custom_call.1} parent=1 // pred_region
      _
    $region9: #{tpu_custom_call.1} parent=1 // pred_fallthru
      _
    // Predicated region
    $region10: #{tpu_custom_call.1} parent=1 // pred_check
      _
    $region11: #{tpu_custom_call.1} parent=1 // pred_check_branch
      %25 = sbr.rel (0) target = $region13
    $region12: #{tpu_custom_call.1} parent=1 // pred_region
      _
    $region13: #{tpu_custom_call.1} parent=1 // pred_fallthru
      _
    // Predicated region
    $region14: #{tpu_custom_call.1} parent=1 // pred_check
      _
    $region15: #{tpu_custom_call.1} parent=1 // pred_check_branch
      %27 = sbr.rel (0) target = $region17
    $region16: #{tpu_custom_call.1} parent=1 // pred_region
      %28 = dma.done [#allocation3], 256
    $region17: #{tpu_custom_call.1} parent=1 // pred_fallthru
      _
    %v29 = vld [vmem:[#allocation2] sm:$0xff]
    %v30 = vld [vmem:[#allocation2 + $0x8] sm:$0xff]
    %vm31 = vcmask 261120
    %v32 = vsel %vm31, %v29, 0.0
    %v33 = vsel %vm31, %v30, 0.0
    %v34 = vadd.f32 %v32, %v33
    %v35 = vrot.slane %v34, 4
    %v36 = vadd.f32 %v34, %v35
    %v37 = vrot.slane %v36, 2
    %v38 = vadd.f32 %v36, %v37
    %v39 = vrot.slane %v38, 1
    %v40 = vadd.f32 %v38, %v39
    %v41 = vmul.f32 %v40, 0.0625
    %v42 = vmul.f32 %v29, %v29
    %v43 = vmul.f32 %v30, %v30
    %v44 = vsel %vm31, %v42, 0.0
    %v45 = vsel %vm31, %v43, 0.0
    %v46 = vadd.f32 %v44, %v45
    %v47 = vrot.slane %v46, 4
    %v48 = vadd.f32 %v46, %v47
    %v49 = vrot.slane %v48, 2
    %v50 = vadd.f32 %v48, %v49
    %v51 = vrot.slane %v50, 1
    %v52 = vadd.f32 %v50, %v51
    %v53 = vmul.f32 %v52, 0.0625
    %v54 = vmul.f32 %v41, %v41
    %v55 = vsub.f32 %v53, %v54
    %v56 = vmax.f32 %v55, 0.0
    %v57 = vadd.f32 %v56, 1e-05
    %v58 = vrsqrt.pop %v57
    %v59 = vld [vmem:[%s1] sm:$0x1]
    %v60 = vmul.f32 %v59, %v58
    %v61 = vld [vmem:[%s2] sm:$0x1]
    %v62 = vmul.f32 %v41, %v60
    %v63 = vsub.f32 %v61, %v62
    %v65 = vlaneseq
    %v66 = vshrl.u32 %v65, 7
    %v67 = vsub.s32 0, %v66
    %v68 = vrot.slane %v60, %v67
    %v70 = vmul.f32 %v29, %v68
    %v71 = vmul.f32 %v30, %v68
    %v73 = vlaneseq
    %v74 = vshrl.u32 %v73, 7
    %v75 = vsub.s32 0, %v74
    %v76 = vrot.slane %v63, %v75
    %v78 = vadd.f32 %v70, %v76
    %v79 = vadd.f32 %v71, %v76
    %80 = vst.msk [vmem:[#allocation5] sm:$0xff] %vm31, %v78
    %81 = vst.msk [vmem:[#allocation5 + $0x8] sm:$0xff] %vm31, %v79
    // Predicated region
    $region18: #{tpu_custom_call.1} parent=1 // pred_check
      _
    $region19: #{tpu_custom_call.1} parent=1 // pred_check_branch
      %83 = sbr.rel (0) target = $region21
    $region20: #{tpu_custom_call.1} parent=1 // pred_region
      %s85 = ssub.s32 256, 256
      %86 = vsyncadd [#allocation4], %s85
      %s87 = sshll.u32 [#allocation5], 4
      %s88 = int_to_ptr.vmem [resolvable:$true] %s87
      %93 = dma.vmem_to_hbm [thread:$0]  %s88, 256, %s3, [#allocation4], 128, 128, 8
    $region21: #{tpu_custom_call.1} parent=1 // pred_fallthru
      _
    // Predicated region
    $region22: #{tpu_custom_call.1} parent=1 // pred_check
      _
    $region23: #{tpu_custom_call.1} parent=1 // pred_check_branch
      %95 = sbr.rel (0) target = $region25
    $region24: #{tpu_custom_call.1} parent=1 // pred_region
      %96 = dma.done [#allocation4], 256
    $region25: #{tpu_custom_call.1} parent=1 // pred_fallthru
      _
    %97 = vsyncpa [#allocation3], 1
    %98 = vsyncpa [#allocation4], 1

</llo_original>
